<compile_context>
chip_gen: v5e
topology: v5e:2x2
jax: 0.10.0
libtpu: 0.0.40
codegen_flags: <defaults>
</compile_context>

<pallas_src>
import functools

import jax
import jax.numpy as jnp
from jax import lax
from jax.experimental import pallas as pl
from jax.experimental.pallas import tpu as pltpu

_LANES = 128        # vreg lane width
_CHUNK_ROWS = 8     # (8, 128) f32 chunk == exactly one vreg per class slab


def _dice_kernel(x_ref, t_ref, inter_ref, card_ref, *,
                 hw, num_classes, rows_per_tile, tiles_per_split,
                 full_tiles, need_mask):
    """One (batch, split, spatial-tile) step of the streaming Dice reduction.

    x_ref:     (1, C, R, 128)      logits tile (pixels dense on sublane+lane)
    t_ref:     (1, 1, R, 128)      integer labels tile
    inter_ref: (1, 1, C, 8, 128)   per-class partial intersection (resident)
    card_ref:  (1, 1, C, 8, 128)   per-class partial cardinality  (resident)
    """
    C = num_classes
    n_chunks = rows_per_tile // _CHUNK_ROWS          # exact by construction
    s = pl.program_id(1)
    i = pl.program_id(2)
    global_tile = s * tiles_per_split + i

    @pl.when(i == 0)
    def _init():
        inter_ref[...] = jnp.zeros_like(inter_ref)
        card_ref[...] = jnp.zeros_like(card_ref)

    def run_tile(masked):
        def body(j, carry):
            accs_i, accs_c = carry
            r0 = pl.multiple_of(j * _CHUNK_ROWS, _CHUNK_ROWS)
            t = t_ref[0, 0, pl.ds(r0, _CHUNK_ROWS), :].astype(jnp.int32)
            xs = [x_ref[0, c, pl.ds(r0, _CHUNK_ROWS), :].astype(jnp.float32)
                  for c in range(C)]

            if masked:
                # Global pixel index of each (row, lane) element of this chunk.
                row = lax.broadcasted_iota(jnp.int32, (_CHUNK_ROWS, _LANES), 0)
                lane = lax.broadcasted_iota(jnp.int32, (_CHUNK_ROWS, _LANES), 1)
                gpix = (global_tile * rows_per_tile + r0 + row) * _LANES + lane
                valid = gpix < hw
                # Mask BEFORE max/exp: OOB / pad garbage must not reach softmax.
                xs = [jnp.where(valid, x, 0.0) for x in xs]

            # Softmax over classes as elementwise ops across the C slabs.
            m = xs[0]
            for c in range(1, C):
                m = jnp.maximum(m, xs[c])
            es = [jnp.exp(x - m) for x in xs]
            denom = es[0]
            for c in range(1, C):
                denom = denom + es[c]
            inv = pl.reciprocal(denom, approx=False)

            new_i, new_c = [], []
            for c in range(C):
                p = es[c] * inv
                oh = (t == c).astype(jnp.float32)
                ic = p * oh
                cc = p + oh
                if masked:
                    ic = jnp.where(valid, ic, 0.0)
                    cc = jnp.where(valid, cc, 0.0)
                new_i.append(accs_i[c] + ic)
                new_c.append(accs_c[c] + cc)
            return tuple(new_i), tuple(new_c)

        zeros = tuple(jnp.zeros((_CHUNK_ROWS, _LANES), jnp.float32)
                      for _ in range(C))
        accs_i, accs_c = lax.fori_loop(0, n_chunks, body, (zeros, zeros))
        # One read-modify-write of the resident accumulator slabs per tile.
        for c in range(C):
            inter_ref[0, 0, c] += accs_i[c]
            card_ref[0, 0, c] += accs_c[c]

    if not need_mask:
        run_tile(masked=False)
    elif full_tiles == 0:
        run_tile(masked=True)
    else:
        @pl.when(global_tile < full_tiles)
        def _unmasked():
            run_tile(masked=False)

        @pl.when(global_tile >= full_tiles)
        def _masked():
            run_tile(masked=True)


def _pick_rows_per_tile(rows_total, n_classes, x_itemsize, t_itemsize):
    """~4 MiB of inputs per grid step, multiple of 8 rows, capped by the data."""
    per_row_bytes = _LANES * (n_classes * x_itemsize + t_itemsize)
    target_rows = (4 << 20) // max(1, per_row_bytes)
    target_rows = max(_CHUNK_ROWS, (target_rows // _CHUNK_ROWS) * _CHUNK_ROWS)
    if rows_total <= target_rows:
        return rows_total
    return target_rows


def dice_loss_pallas(logits_nchw, target_n1hw, *, eps=1e-7, _tile_rows=None):
    """DICELoss.forward: target.squeeze(1); soft-Dice over softmax(logits)."""
    N, C, H, W = logits_nchw.shape
    HW = H * W

    x = logits_nchw.reshape(N, C, HW)
    t = target_n1hw.reshape(N, 1, HW)        # squeeze(1) handled in-kernel

    # Pad the flattened spatial axis up to a multiple of 8*128 so the
    # (rows, 128) reshape is contiguous and every in-kernel chunk is a full
    # (8, 128) vreg.  Free for typical image sizes (HW % 1024 == 0); the
    # padded pixels are masked in-kernel on the affected tiles only.
    pad_to = _CHUNK_ROWS * _LANES
    hw_pad = pl.cdiv(HW, pad_to) * pad_to
    if hw_pad != HW:
        x = jnp.pad(x, ((0, 0), (0, 0), (0, hw_pad - HW)))
        t = jnp.pad(t, ((0, 0), (0, 0), (0, hw_pad - HW)))
    rows_total = hw_pad // _LANES
    x = x.reshape(N, C, rows_total, _LANES)
    t = t.reshape(N, 1, rows_total, _LANES)

    x_item = jnp.dtype(x.dtype).itemsize
    t_item = jnp.dtype(t.dtype).itemsize
    if _tile_rows is None:
        rows_per_tile = _pick_rows_per_tile(rows_total, C, x_item, t_item)
    else:  # test hook: force small tiles to exercise multi-tile streaming
        rows_per_tile = min(rows_total,
                            max(_CHUNK_ROWS,
                                (_tile_rows // _CHUNK_ROWS) * _CHUNK_ROWS))
    num_tiles = pl.cdiv(rows_total, rows_per_tile)

    # 2-way spatial split so both v7x TensorCores are busy when N == 1;
    # harmless elsewhere (just one more partial slab summed in the epilogue).
    n_splits = 2 if (N == 1 and num_tiles >= 2) else 1
    tiles_per_split = pl.cdiv(num_tiles, n_splits)
    total_tiles = n_splits * tiles_per_split

    tile_pixels = rows_per_tile * _LANES
    full_tiles = HW // tile_pixels                 # tiles with no invalid pixels
    need_mask = (total_tiles * tile_pixels) != HW

    # Clamp the row-block index so an over-covering split step never issues a
    # fully out-of-bounds DMA; its contribution is zeroed by the mask anyway.
    def in_map(n, s, i):
        return (n, 0, jnp.minimum(s * tiles_per_split + i, num_tiles - 1), 0)

    kernel = functools.partial(
        _dice_kernel, hw=HW, num_classes=C, rows_per_tile=rows_per_tile,
        tiles_per_split=tiles_per_split, full_tiles=full_tiles,
        need_mask=need_mask)

    inter_p, card_p = pl.pallas_call(
        kernel,
        out_shape=[
            jax.ShapeDtypeStruct((N, n_splits, C, _CHUNK_ROWS, _LANES),
                                 jnp.float32),
            jax.ShapeDtypeStruct((N, n_splits, C, _CHUNK_ROWS, _LANES),
                                 jnp.float32),
        ],
        grid_spec=pltpu.PrefetchScalarGridSpec(
            num_scalar_prefetch=0,
            grid=(N, n_splits, tiles_per_split),
            in_specs=[
                pl.BlockSpec((1, C, rows_per_tile, _LANES), in_map),
                pl.BlockSpec((1, 1, rows_per_tile, _LANES), in_map),
            ],
            out_specs=[
                pl.BlockSpec((1, 1, C, _CHUNK_ROWS, _LANES),
                             lambda n, s, i: (n, s, 0, 0, 0)),
                pl.BlockSpec((1, 1, C, _CHUNK_ROWS, _LANES),
                             lambda n, s, i: (n, s, 0, 0, 0)),
            ],
        ),
        compiler_params=pltpu.CompilerParams(
            dimension_semantics=("parallel", "parallel", "arbitrary")),
    )(x, t)

    # Tiny epilogue in plain JAX: combine per-(batch, split, sublane, lane)
    # partials exactly once.
    inter = jnp.sum(inter_p, axis=(0, 1, 3, 4))    # (C,)
    card = jnp.sum(card_p, axis=(0, 1, 3, 4))      # (C,)
    dice = 2.0 * inter / (card + eps)
    return 1.0 - jnp.mean(dice)


def dice_loss_ref(logits_nchw, target_n1hw, eps=1e-7):
    """Pure-JAX reference for the assumed dice_loss semantics."""
    N, C, H, W = logits_nchw.shape
    probs = jax.nn.softmax(logits_nchw.astype(jnp.float32), axis=1)
    tgt = target_n1hw.reshape(N, H, W)
    oh = jnp.transpose(jax.nn.one_hot(tgt, C, dtype=jnp.float32), (0, 3, 1, 2))
    inter = jnp.sum(probs * oh, axis=(0, 2, 3))
    card = jnp.sum(probs + oh, axis=(0, 2, 3))
    return 1.0 - jnp.mean(2.0 * inter / (card + eps))


if __name__ == "__main__":
    key = jax.random.PRNGKey(0)
    k1, k2, k3, k4 = jax.random.split(key, 4)

    # Case 1: module-sized shapes (N=2, C=4, 16x16).  Single tile; exercises
    # the ragged-tail mask (HW=256 is padded to one 1024-pixel tile).
    N, C, H, W = 2, 4, 16, 16
    logits = jax.random.normal(k1, (N, C, H, W), dtype=jnp.float32)
    target = jax.random.randint(k2, (N, 1, H, W), 0, C, dtype=jnp.int32)
    out = jax.block_until_ready(dice_loss_pallas(logits, target))
    ref = jax.block_until_ready(dice_loss_ref(logits, target))
    assert jnp.allclose(out, ref, rtol=1e-5, atol=1e-6), (out, ref)

    # Case 2: multi-tile streaming reduction + 2-way split (N=1) + ragged tail
    # (HW % 128 != 0), with tiles forced small to cover all branches.
    N2, C2, H2, W2 = 1, 3, 40, 52
    logits2 = jax.random.normal(k3, (N2, C2, H2, W2), dtype=jnp.float32)
    target2 = jax.random.randint(k4, (N2, 1, H2, W2), 0, C2, dtype=jnp.int32)
    out2 = jax.block_until_ready(dice_loss_pallas(logits2, target2, _tile_rows=8))
    ref2 = jax.block_until_ready(dice_loss_ref(logits2, target2))
    assert jnp.allclose(out2, ref2, rtol=1e-5, atol=1e-6), (out2, ref2)

    print("KERNEL_OK")
</pallas_src>

<mosaic_0001>
module attributes {stable_mosaic.version = 11 : i64} {
  func.func @_dice_kernel(%arg0: i32, %arg1: i32, %arg2: i32, %arg3: memref<1x4x8x128xf32, #tpu.memory_space<vmem>>, %arg4: memref<1x1x8x128xi32, #tpu.memory_space<vmem>>, %arg5: memref<1x1x4x8x128xf32, #tpu.memory_space<vmem>>, %arg6: memref<1x1x4x8x128xf32, #tpu.memory_space<vmem>>) attributes {dimension_semantics = [#tpu.dimension_semantics<parallel>, #tpu.dimension_semantics<parallel>, #tpu.dimension_semantics<arbitrary>], iteration_bounds = array<i64: 2, 1, 1>, scalar_prefetch = 0 : i64, scratch_operands = 0 : i64, tpu.core_type = #tpu.core_type<tc>, window_params = [{transform_indices = @transform_0, window_bounds = array<i64: 1, 4, 8, 128>}, {transform_indices = @transform_1, window_bounds = array<i64: 1, 1, 8, 128>}, {transform_indices = @transform_2, window_bounds = array<i64: 1, 1, 4, 8, 128>}, {transform_indices = @transform_3, window_bounds = array<i64: 1, 1, 4, 8, 128>}]} {
    %c1_i32 = arith.constant 1 : i32
    %0 = arith.muli %arg1, %c1_i32 : i32
    %1 = arith.addi %0, %arg2 : i32
    %c0_i32 = arith.constant 0 : i32
    %2 = arith.cmpi eq, %arg2, %c0_i32 : i32
    %3 = arith.extui %2 : i1 to i32
    %c0_i32_0 = arith.constant 0 : i32
    %4 = arith.cmpi ne, %3, %c0_i32_0 : i32
    scf.if %4 {
      %cst_112 = arith.constant 0.000000e+00 : f32
      %160 = vector.broadcast %cst_112 : f32 to vector<1x1x4x8x128xf32>
      %c0_113 = arith.constant 0 : index
      %c0_114 = arith.constant 0 : index
      %c0_115 = arith.constant 0 : index
      %c0_116 = arith.constant 0 : index
      %c0_117 = arith.constant 0 : index
      %161 = vector.load %arg5[%c0_113, %c0_114, %c0_115, %c0_116, %c0_117] : memref<1x1x4x8x128xf32, #tpu.memory_space<vmem>>, vector<1x1x4x8x128xf32>
      tpu.vector_store %arg5[%c0_113, %c0_114, %c0_115, %c0_116, %c0_117], %160 {strides = array<i32>} : memref<1x1x4x8x128xf32, #tpu.memory_space<vmem>>, vector<1x1x4x8x128xf32>,
      %cst_118 = arith.constant 0.000000e+00 : f32
      %162 = vector.broadcast %cst_118 : f32 to vector<1x1x4x8x128xf32>
      %c0_119 = arith.constant 0 : index
      %c0_120 = arith.constant 0 : index
      %c0_121 = arith.constant 0 : index
      %c0_122 = arith.constant 0 : index
      %c0_123 = arith.constant 0 : index
      %163 = vector.load %arg6[%c0_119, %c0_120, %c0_121, %c0_122, %c0_123] : memref<1x1x4x8x128xf32, #tpu.memory_space<vmem>>, vector<1x1x4x8x128xf32>
      tpu.vector_store %arg6[%c0_119, %c0_120, %c0_121, %c0_122, %c0_123], %162 {strides = array<i32>} : memref<1x1x4x8x128xf32, #tpu.memory_space<vmem>>, vector<1x1x4x8x128xf32>,
    } else {
    }
    %cst = arith.constant 0.000000e+00 : f32
    %5 = vector.broadcast %cst : f32 to vector<8x128xf32>
    %cst_1 = arith.constant 0.000000e+00 : f32
    %6 = vector.broadcast %cst_1 : f32 to vector<8x128xf32>
    %cst_2 = arith.constant 0.000000e+00 : f32
    %7 = vector.broadcast %cst_2 : f32 to vector<8x128xf32>
    %cst_3 = arith.constant 0.000000e+00 : f32
    %8 = vector.broadcast %cst_3 : f32 to vector<8x128xf32>
    %c0_i32_4 = arith.constant 0 : i32
    %c8_i32 = arith.constant 8 : i32
    %9 = arith.muli %c0_i32_4, %c8_i32 : i32
    %10 = tpu.assume_multiple %9, 8 : i32
    %c0 = arith.constant 0 : index
    %c0_5 = arith.constant 0 : index
    %11 = arith.index_cast %10 : i32 to index
    %c0_6 = arith.constant 0 : index
    %12 = vector.load %arg4[%c0, %c0_5, %11, %c0_6] : memref<1x1x8x128xi32, #tpu.memory_space<vmem>>, vector<1x1x8x128xi32>
    %13 = vector.shape_cast %12 : vector<1x1x8x128xi32> to vector<8x128xi32>
    %c0_7 = arith.constant 0 : index
    %c0_8 = arith.constant 0 : index
    %14 = arith.index_cast %10 : i32 to index
    %c0_9 = arith.constant 0 : index
    %15 = vector.load %arg3[%c0_7, %c0_8, %14, %c0_9] : memref<1x4x8x128xf32, #tpu.memory_space<vmem>>, vector<1x1x8x128xf32>
    %16 = vector.shape_cast %15 : vector<1x1x8x128xf32> to vector<8x128xf32>
    %c0_10 = arith.constant 0 : index
    %c1 = arith.constant 1 : index
    %17 = arith.index_cast %10 : i32 to index
    %c0_11 = arith.constant 0 : index
    %18 = vector.load %arg3[%c0_10, %c1, %17, %c0_11] : memref<1x4x8x128xf32, #tpu.memory_space<vmem>>, vector<1x1x8x128xf32>
    %19 = vector.shape_cast %18 : vector<1x1x8x128xf32> to vector<8x128xf32>
    %c0_12 = arith.constant 0 : index
    %c2 = arith.constant 2 : index
    %20 = arith.index_cast %10 : i32 to index
    %c0_13 = arith.constant 0 : index
    %21 = vector.load %arg3[%c0_12, %c2, %20, %c0_13] : memref<1x4x8x128xf32, #tpu.memory_space<vmem>>, vector<1x1x8x128xf32>
    %22 = vector.shape_cast %21 : vector<1x1x8x128xf32> to vector<8x128xf32>
    %c0_14 = arith.constant 0 : index
    %c3 = arith.constant 3 : index
    %23 = arith.index_cast %10 : i32 to index
    %c0_15 = arith.constant 0 : index
    %24 = vector.load %arg3[%c0_14, %c3, %23, %c0_15] : memref<1x4x8x128xf32, #tpu.memory_space<vmem>>, vector<1x1x8x128xf32>
    %25 = vector.shape_cast %24 : vector<1x1x8x128xf32> to vector<8x128xf32>
    %26 = tpu.iota {dimensions = array<i32: 0>} : vector<8x128xi32>
    %27 = tpu.iota {dimensions = array<i32: 1>} : vector<8x128xi32>
    %c8_i32_16 = arith.constant 8 : i32
    %28 = arith.muli %1, %c8_i32_16 : i32
    %29 = arith.addi %28, %10 : i32
    %30 = vector.broadcast %29 : i32 to vector<8x128xi32>
    %31 = arith.addi %30, %26 : vector<8x128xi32>
    %c128_i32 = arith.constant 128 : i32
    %32 = vector.broadcast %c128_i32 : i32 to vector<8x128xi32>
    %33 = arith.muli %31, %32 : vector<8x128xi32>
    %34 = arith.addi %33, %27 : vector<8x128xi32>
    %c256_i32 = arith.constant 256 : i32
    %35 = vector.broadcast %c256_i32 : i32 to vector<8x128xi32>
    %36 = arith.cmpi slt, %34, %35 : vector<8x128xi32>
    %cst_17 = arith.constant 0.000000e+00 : f32
    %37 = vector.broadcast %cst_17 : f32 to vector<8x128xf32>
    %38 = arith.select %36, %16, %37 : vector<8x128xi1>, vector<8x128xf32>
    %cst_18 = arith.constant 0.000000e+00 : f32
    %39 = vector.broadcast %cst_18 : f32 to vector<8x128xf32>
    %40 = arith.select %36, %19, %39 : vector<8x128xi1>, vector<8x128xf32>
    %cst_19 = arith.constant 0.000000e+00 : f32
    %41 = vector.broadcast %cst_19 : f32 to vector<8x128xf32>
    %42 = arith.select %36, %22, %41 : vector<8x128xi1>, vector<8x128xf32>
    %cst_20 = arith.constant 0.000000e+00 : f32
    %43 = vector.broadcast %cst_20 : f32 to vector<8x128xf32>
    %44 = arith.select %36, %25, %43 : vector<8x128xi1>, vector<8x128xf32>
    %45 = arith.maximumf %38, %40 : vector<8x128xf32>
    %46 = arith.maximumf %45, %42 : vector<8x128xf32>
    %47 = arith.maximumf %46, %44 : vector<8x128xf32>
    %48 = arith.subf %38, %47 : vector<8x128xf32>
    %49 = math.exp %48 : vector<8x128xf32>
    %50 = arith.subf %40, %47 : vector<8x128xf32>
    %51 = math.exp %50 : vector<8x128xf32>
    %52 = arith.subf %42, %47 : vector<8x128xf32>
    %53 = math.exp %52 : vector<8x128xf32>
    %54 = arith.subf %44, %47 : vector<8x128xf32>
    %55 = math.exp %54 : vector<8x128xf32>
    %56 = arith.addf %49, %51 : vector<8x128xf32>
    %57 = arith.addf %56, %53 : vector<8x128xf32>
    %58 = arith.addf %57, %55 : vector<8x128xf32>
    %59 = tpu.reciprocal %58 : vector<8x128xf32> -> vector<8x128xf32>
    %60 = arith.mulf %49, %59 : vector<8x128xf32>
    %c0_i32_21 = arith.constant 0 : i32
    %61 = vector.broadcast %c0_i32_21 : i32 to vector<8x128xi32>
    %62 = arith.cmpi eq, %13, %61 : vector<8x128xi32>
    %63 = arith.extui %62 : vector<8x128xi1> to vector<8x128xi32>
    %64 = arith.sitofp %63 : vector<8x128xi32> to vector<8x128xf32>
    %65 = arith.mulf %60, %64 : vector<8x128xf32>
    %66 = arith.addf %60, %64 : vector<8x128xf32>
    %cst_22 = arith.constant 0.000000e+00 : f32
    %67 = vector.broadcast %cst_22 : f32 to vector<8x128xf32>
    %68 = arith.select %36, %65, %67 : vector<8x128xi1>, vector<8x128xf32>
    %cst_23 = arith.constant 0.000000e+00 : f32
    %69 = vector.broadcast %cst_23 : f32 to vector<8x128xf32>
    %70 = arith.select %36, %66, %69 : vector<8x128xi1>, vector<8x128xf32>
    %71 = arith.addf %5, %68 : vector<8x128xf32>
    %72 = arith.addf %5, %70 : vector<8x128xf32>
    %73 = arith.mulf %51, %59 : vector<8x128xf32>
    %c1_i32_24 = arith.constant 1 : i32
    %74 = vector.broadcast %c1_i32_24 : i32 to vector<8x128xi32>
    %75 = arith.cmpi eq, %13, %74 : vector<8x128xi32>
    %76 = arith.extui %75 : vector<8x128xi1> to vector<8x128xi32>
    %77 = arith.sitofp %76 : vector<8x128xi32> to vector<8x128xf32>
    %78 = arith.mulf %73, %77 : vector<8x128xf32>
    %79 = arith.addf %73, %77 : vector<8x128xf32>
    %cst_25 = arith.constant 0.000000e+00 : f32
    %80 = vector.broadcast %cst_25 : f32 to vector<8x128xf32>
    %81 = arith.select %36, %78, %80 : vector<8x128xi1>, vector<8x128xf32>
    %cst_26 = arith.constant 0.000000e+00 : f32
    %82 = vector.broadcast %cst_26 : f32 to vector<8x128xf32>
    %83 = arith.select %36, %79, %82 : vector<8x128xi1>, vector<8x128xf32>
    %84 = arith.addf %6, %81 : vector<8x128xf32>
    %85 = arith.addf %6, %83 : vector<8x128xf32>
    %86 = arith.mulf %53, %59 : vector<8x128xf32>
    %c2_i32 = arith.constant 2 : i32
    %87 = vector.broadcast %c2_i32 : i32 to vector<8x128xi32>
    %88 = arith.cmpi eq, %13, %87 : vector<8x128xi32>
    %89 = arith.extui %88 : vector<8x128xi1> to vector<8x128xi32>
    %90 = arith.sitofp %89 : vector<8x128xi32> to vector<8x128xf32>
    %91 = arith.mulf %86, %90 : vector<8x128xf32>
    %92 = arith.addf %86, %90 : vector<8x128xf32>
    %cst_27 = arith.constant 0.000000e+00 : f32
    %93 = vector.broadcast %cst_27 : f32 to vector<8x128xf32>
    %94 = arith.select %36, %91, %93 : vector<8x128xi1>, vector<8x128xf32>
    %cst_28 = arith.constant 0.000000e+00 : f32
    %95 = vector.broadcast %cst_28 : f32 to vector<8x128xf32>
    %96 = arith.select %36, %92, %95 : vector<8x128xi1>, vector<8x128xf32>
    %97 = arith.addf %7, %94 : vector<8x128xf32>
    %98 = arith.addf %7, %96 : vector<8x128xf32>
    %99 = arith.mulf %55, %59 : vector<8x128xf32>
    %c3_i32 = arith.constant 3 : i32
    %100 = vector.broadcast %c3_i32 : i32 to vector<8x128xi32>
    %101 = arith.cmpi eq, %13, %100 : vector<8x128xi32>
    %102 = arith.extui %101 : vector<8x128xi1> to vector<8x128xi32>
    %103 = arith.sitofp %102 : vector<8x128xi32> to vector<8x128xf32>
    %104 = arith.mulf %99, %103 : vector<8x128xf32>
    %105 = arith.addf %99, %103 : vector<8x128xf32>
    %cst_29 = arith.constant 0.000000e+00 : f32
    %106 = vector.broadcast %cst_29 : f32 to vector<8x128xf32>
    %107 = arith.select %36, %104, %106 : vector<8x128xi1>, vector<8x128xf32>
    %cst_30 = arith.constant 0.000000e+00 : f32
    %108 = vector.broadcast %cst_30 : f32 to vector<8x128xf32>
    %109 = arith.select %36, %105, %108 : vector<8x128xi1>, vector<8x128xf32>
    %110 = arith.addf %8, %107 : vector<8x128xf32>
    %111 = arith.addf %8, %109 : vector<8x128xf32>
    %c1_i32_31 = arith.constant 1 : i32
    %c0_32 = arith.constant 0 : index
    %c0_33 = arith.constant 0 : index
    %c0_34 = arith.constant 0 : index
    %c0_35 = arith.constant 0 : index
    %c0_36 = arith.constant 0 : index
    %112 = vector.load %arg5[%c0_32, %c0_33, %c0_34, %c0_35, %c0_36] : memref<1x1x4x8x128xf32, #tpu.memory_space<vmem>>, vector<1x1x1x8x128xf32>
    %113 = vector.shape_cast %112 : vector<1x1x1x8x128xf32> to vector<8x128xf32>
    %114 = arith.addf %113, %71 : vector<8x128xf32>
    %c0_37 = arith.constant 0 : index
    %c0_38 = arith.constant 0 : index
    %c0_39 = arith.constant 0 : index
    %c0_40 = arith.constant 0 : index
    %c0_41 = arith.constant 0 : index
    %115 = vector.load %arg5[%c0_37, %c0_38, %c0_39, %c0_40, %c0_41] : memref<1x1x4x8x128xf32, #tpu.memory_space<vmem>>, vector<1x1x1x8x128xf32>
    %116 = vector.shape_cast %115 : vector<1x1x1x8x128xf32> to vector<8x128xf32>
    %117 = vector.shape_cast %114 : vector<8x128xf32> to vector<1x1x1x8x128xf32>
    tpu.vector_store %arg5[%c0_37, %c0_38, %c0_39, %c0_40, %c0_41], %117 {strides = array<i32>} : memref<1x1x4x8x128xf32, #tpu.memory_space<vmem>>, vector<1x1x1x8x128xf32>,
    %c0_42 = arith.constant 0 : index
    %c0_43 = arith.constant 0 : index
    %c0_44 = arith.constant 0 : index
    %c0_45 = arith.constant 0 : index
    %c0_46 = arith.constant 0 : index
    %118 = vector.load %arg6[%c0_42, %c0_43, %c0_44, %c0_45, %c0_46] : memref<1x1x4x8x128xf32, #tpu.memory_space<vmem>>, vector<1x1x1x8x128xf32>
    %119 = vector.shape_cast %118 : vector<1x1x1x8x128xf32> to vector<8x128xf32>
    %120 = arith.addf %119, %72 : vector<8x128xf32>
    %c0_47 = arith.constant 0 : index
    %c0_48 = arith.constant 0 : index
    %c0_49 = arith.constant 0 : index
    %c0_50 = arith.constant 0 : index
    %c0_51 = arith.constant 0 : index
    %121 = vector.load %arg6[%c0_47, %c0_48, %c0_49, %c0_50, %c0_51] : memref<1x1x4x8x128xf32, #tpu.memory_space<vmem>>, vector<1x1x1x8x128xf32>
    %122 = vector.shape_cast %121 : vector<1x1x1x8x128xf32> to vector<8x128xf32>
    %123 = vector.shape_cast %120 : vector<8x128xf32> to vector<1x1x1x8x128xf32>
    tpu.vector_store %arg6[%c0_47, %c0_48, %c0_49, %c0_50, %c0_51], %123 {strides = array<i32>} : memref<1x1x4x8x128xf32, #tpu.memory_space<vmem>>, vector<1x1x1x8x128xf32>,
    %c0_52 = arith.constant 0 : index
    %c0_53 = arith.constant 0 : index
    %c1_54 = arith.constant 1 : index
    %c0_55 = arith.constant 0 : index
    %c0_56 = arith.constant 0 : index
    %124 = vector.load %arg5[%c0_52, %c0_53, %c1_54, %c0_55, %c0_56] : memref<1x1x4x8x128xf32, #tpu.memory_space<vmem>>, vector<1x1x1x8x128xf32>
    %125 = vector.shape_cast %124 : vector<1x1x1x8x128xf32> to vector<8x128xf32>
    %126 = arith.addf %125, %84 : vector<8x128xf32>
    %c0_57 = arith.constant 0 : index
    %c0_58 = arith.constant 0 : index
    %c1_59 = arith.constant 1 : index
    %c0_60 = arith.constant 0 : index
    %c0_61 = arith.constant 0 : index
    %127 = vector.load %arg5[%c0_57, %c0_58, %c1_59, %c0_60, %c0_61] : memref<1x1x4x8x128xf32, #tpu.memory_space<vmem>>, vector<1x1x1x8x128xf32>
    %128 = vector.shape_cast %127 : vector<1x1x1x8x128xf32> to vector<8x128xf32>
    %129 = vector.shape_cast %126 : vector<8x128xf32> to vector<1x1x1x8x128xf32>
    tpu.vector_store %arg5[%c0_57, %c0_58, %c1_59, %c0_60, %c0_61], %129 {strides = array<i32>} : memref<1x1x4x8x128xf32, #tpu.memory_space<vmem>>, vector<1x1x1x8x128xf32>,
    %c0_62 = arith.constant 0 : index
    %c0_63 = arith.constant 0 : index
    %c1_64 = arith.constant 1 : index
    %c0_65 = arith.constant 0 : index
    %c0_66 = arith.constant 0 : index
    %130 = vector.load %arg6[%c0_62, %c0_63, %c1_64, %c0_65, %c0_66] : memref<1x1x4x8x128xf32, #tpu.memory_space<vmem>>, vector<1x1x1x8x128xf32>
    %131 = vector.shape_cast %130 : vector<1x1x1x8x128xf32> to vector<8x128xf32>
    %132 = arith.addf %131, %85 : vector<8x128xf32>
    %c0_67 = arith.constant 0 : index
    %c0_68 = arith.constant 0 : index
    %c1_69 = arith.constant 1 : index
    %c0_70 = arith.constant 0 : index
    %c0_71 = arith.constant 0 : index
    %133 = vector.load %arg6[%c0_67, %c0_68, %c1_69, %c0_70, %c0_71] : memref<1x1x4x8x128xf32, #tpu.memory_space<vmem>>, vector<1x1x1x8x128xf32>
    %134 = vector.shape_cast %133 : vector<1x1x1x8x128xf32> to vector<8x128xf32>
    %135 = vector.shape_cast %132 : vector<8x128xf32> to vector<1x1x1x8x128xf32>
    tpu.vector_store %arg6[%c0_67, %c0_68, %c1_69, %c0_70, %c0_71], %135 {strides = array<i32>} : memref<1x1x4x8x128xf32, #tpu.memory_space<vmem>>, vector<1x1x1x8x128xf32>,
    %c0_72 = arith.constant 0 : index
    %c0_73 = arith.constant 0 : index
    %c2_74 = arith.constant 2 : index
    %c0_75 = arith.constant 0 : index
    %c0_76 = arith.constant 0 : index
    %136 = vector.load %arg5[%c0_72, %c0_73, %c2_74, %c0_75, %c0_76] : memref<1x1x4x8x128xf32, #tpu.memory_space<vmem>>, vector<1x1x1x8x128xf32>
    %137 = vector.shape_cast %136 : vector<1x1x1x8x128xf32> to vector<8x128xf32>
    %138 = arith.addf %137, %97 : vector<8x128xf32>
    %c0_77 = arith.constant 0 : index
    %c0_78 = arith.constant 0 : index
    %c2_79 = arith.constant 2 : index
    %c0_80 = arith.constant 0 : index
    %c0_81 = arith.constant 0 : index
    %139 = vector.load %arg5[%c0_77, %c0_78, %c2_79, %c0_80, %c0_81] : memref<1x1x4x8x128xf32, #tpu.memory_space<vmem>>, vector<1x1x1x8x128xf32>
    %140 = vector.shape_cast %139 : vector<1x1x1x8x128xf32> to vector<8x128xf32>
    %141 = vector.shape_cast %138 : vector<8x128xf32> to vector<1x1x1x8x128xf32>
    tpu.vector_store %arg5[%c0_77, %c0_78, %c2_79, %c0_80, %c0_81], %141 {strides = array<i32>} : memref<1x1x4x8x128xf32, #tpu.memory_space<vmem>>, vector<1x1x1x8x128xf32>,
    %c0_82 = arith.constant 0 : index
    %c0_83 = arith.constant 0 : index
    %c2_84 = arith.constant 2 : index
    %c0_85 = arith.constant 0 : index
    %c0_86 = arith.constant 0 : index
    %142 = vector.load %arg6[%c0_82, %c0_83, %c2_84, %c0_85, %c0_86] : memref<1x1x4x8x128xf32, #tpu.memory_space<vmem>>, vector<1x1x1x8x128xf32>
    %143 = vector.shape_cast %142 : vector<1x1x1x8x128xf32> to vector<8x128xf32>
    %144 = arith.addf %143, %98 : vector<8x128xf32>
    %c0_87 = arith.constant 0 : index
    %c0_88 = arith.constant 0 : index
    %c2_89 = arith.constant 2 : index
    %c0_90 = arith.constant 0 : index
    %c0_91 = arith.constant 0 : index
    %145 = vector.load %arg6[%c0_87, %c0_88, %c2_89, %c0_90, %c0_91] : memref<1x1x4x8x128xf32, #tpu.memory_space<vmem>>, vector<1x1x1x8x128xf32>
    %146 = vector.shape_cast %145 : vector<1x1x1x8x128xf32> to vector<8x128xf32>
    %147 = vector.shape_cast %144 : vector<8x128xf32> to vector<1x1x1x8x128xf32>
    tpu.vector_store %arg6[%c0_87, %c0_88, %c2_89, %c0_90, %c0_91], %147 {strides = array<i32>} : memref<1x1x4x8x128xf32, #tpu.memory_space<vmem>>, vector<1x1x1x8x128xf32>,
    %c0_92 = arith.constant 0 : index
    %c0_93 = arith.constant 0 : index
    %c3_94 = arith.constant 3 : index
    %c0_95 = arith.constant 0 : index
    %c0_96 = arith.constant 0 : index
    %148 = vector.load %arg5[%c0_92, %c0_93, %c3_94, %c0_95, %c0_96] : memref<1x1x4x8x128xf32, #tpu.memory_space<vmem>>, vector<1x1x1x8x128xf32>
    %149 = vector.shape_cast %148 : vector<1x1x1x8x128xf32> to vector<8x128xf32>
    %150 = arith.addf %149, %110 : vector<8x128xf32>
    %c0_97 = arith.constant 0 : index
    %c0_98 = arith.constant 0 : index
    %c3_99 = arith.constant 3 : index
    %c0_100 = arith.constant 0 : index
    %c0_101 = arith.constant 0 : index
    %151 = vector.load %arg5[%c0_97, %c0_98, %c3_99, %c0_100, %c0_101] : memref<1x1x4x8x128xf32, #tpu.memory_space<vmem>>, vector<1x1x1x8x128xf32>
    %152 = vector.shape_cast %151 : vector<1x1x1x8x128xf32> to vector<8x128xf32>
    %153 = vector.shape_cast %150 : vector<8x128xf32> to vector<1x1x1x8x128xf32>
    tpu.vector_store %arg5[%c0_97, %c0_98, %c3_99, %c0_100, %c0_101], %153 {strides = array<i32>} : memref<1x1x4x8x128xf32, #tpu.memory_space<vmem>>, vector<1x1x1x8x128xf32>,
    %c0_102 = arith.constant 0 : index
    %c0_103 = arith.constant 0 : index
    %c3_104 = arith.constant 3 : index
    %c0_105 = arith.constant 0 : index
    %c0_106 = arith.constant 0 : index
    %154 = vector.load %arg6[%c0_102, %c0_103, %c3_104, %c0_105, %c0_106] : memref<1x1x4x8x128xf32, #tpu.memory_space<vmem>>, vector<1x1x1x8x128xf32>
    %155 = vector.shape_cast %154 : vector<1x1x1x8x128xf32> to vector<8x128xf32>
    %156 = arith.addf %155, %111 : vector<8x128xf32>
    %c0_107 = arith.constant 0 : index
    %c0_108 = arith.constant 0 : index
    %c3_109 = arith.constant 3 : index
    %c0_110 = arith.constant 0 : index
    %c0_111 = arith.constant 0 : index
    %157 = vector.load %arg6[%c0_107, %c0_108, %c3_109, %c0_110, %c0_111] : memref<1x1x4x8x128xf32, #tpu.memory_space<vmem>>, vector<1x1x1x8x128xf32>
    %158 = vector.shape_cast %157 : vector<1x1x1x8x128xf32> to vector<8x128xf32>
    %159 = vector.shape_cast %156 : vector<8x128xf32> to vector<1x1x1x8x128xf32>
    tpu.vector_store %arg6[%c0_107, %c0_108, %c3_109, %c0_110, %c0_111], %159 {strides = array<i32>} : memref<1x1x4x8x128xf32, #tpu.memory_space<vmem>>, vector<1x1x1x8x128xf32>,
    return
  }
  func.func @transform_0(%arg0: i32, %arg1: i32, %arg2: i32) -> (i32, i32, i32, i32) {
    %c1_i32 = arith.constant 1 : i32
    %0 = arith.muli %arg1, %c1_i32 : i32
    %1 = arith.addi %0, %arg2 : i32
    %c0_i32 = arith.constant 0 : i32
    %2 = arith.minsi %1, %c0_i32 : i32
    %c0_i32_0 = arith.constant 0 : i32
    %c0_i32_1 = arith.constant 0 : i32
    %c0_i32_2 = arith.constant 0 : i32
    return %arg0, %c0_i32_0, %2, %c0_i32_1 : i32, i32, i32, i32
  }
  func.func @transform_1(%arg0: i32, %arg1: i32, %arg2: i32) -> (i32, i32, i32, i32) {
    %c1_i32 = arith.constant 1 : i32
    %0 = arith.muli %arg1, %c1_i32 : i32
    %1 = arith.addi %0, %arg2 : i32
    %c0_i32 = arith.constant 0 : i32
    %2 = arith.minsi %1, %c0_i32 : i32
    %c0_i32_0 = arith.constant 0 : i32
    %c0_i32_1 = arith.constant 0 : i32
    %c0_i32_2 = arith.constant 0 : i32
    return %arg0, %c0_i32_0, %2, %c0_i32_1 : i32, i32, i32, i32
  }
  func.func @transform_2(%arg0: i32, %arg1: i32, %arg2: i32) -> (i32, i32, i32, i32, i32) {
    %c0_i32 = arith.constant 0 : i32
    %c0_i32_0 = arith.constant 0 : i32
    %c0_i32_1 = arith.constant 0 : i32
    %c0_i32_2 = arith.constant 0 : i32
    return %arg0, %arg1, %c0_i32, %c0_i32_0, %c0_i32_1 : i32, i32, i32, i32, i32
  }
  func.func @transform_3(%arg0: i32, %arg1: i32, %arg2: i32) -> (i32, i32, i32, i32, i32) {
    %c0_i32 = arith.constant 0 : i32
    %c0_i32_0 = arith.constant 0 : i32
    %c0_i32_1 = arith.constant 0 : i32
    %c0_i32_2 = arith.constant 0 : i32
    return %arg0, %arg1, %c0_i32, %c0_i32_0, %c0_i32_1 : i32, i32, i32, i32, i32
  }
}

</mosaic_0001>

<llo_original>
// kernel: tpu_custom_call.1
$region0: #{tpu_custom_call.1}
  #allocation0 [shape = 'u32[]', space=smem, size = 0x4, offset = 0x4, fixed_abs, tag = 'smem constant byte address 0x4 - core index']
  #allocation1 [shape = 'u32[72,128]{1,0:T(1,128)}', space=vmem, size = 0x9000, scoped, tag = 'internal scratch']
  %s0 = inlined_call_operand.hbm [shape: f32[2,4,8,128], index: 0, kind: input, shape index: {}]
  %s1 = inlined_call_operand.hbm [shape: s32[2,1,8,128], index: 1, kind: input, shape index: {}]
  %s2 = inlined_call_operand.hbm [shape: f32[2,1,4,8,128], index: 2, kind: output, shape index: {0}]
  %s3 = inlined_call_operand.hbm [shape: f32[2,1,4,8,128], index: 3, kind: output, shape index: {1}]
  %4 = xla_tuple %s2, %s3
  %s5 = sld [smem:[#allocation0]]
  $region61: #{tpu_custom_call.1} parent=0
    _
  %s7 = ssub.s32 1, %s5
  %s8 = scalar_select 0, %s7, %s5
  $region1: #{tpu_custom_call.1} parent=0
    #allocation2 [shape = 'u8[32768]{0}', space=vmem, size = 0x8000, scoped, tag = 'input window, operand 0']
    #allocation3 [shape = 's32[2]{0}', space=sflag, size = 0x8, scoped, tag = 'scoped memory for tpu_custom_call.1']
    #allocation4 [shape = 's32[2]{0}', space=sflag, size = 0x8, scoped, tag = 'scoped memory for tpu_custom_call.1']
    #allocation5 [shape = 'u8[8192]{0}', space=vmem, size = 0x2000, scoped, tag = 'input window, operand 1']
    #allocation6 [shape = 's32[2]{0}', space=sflag, size = 0x8, scoped, tag = 'scoped memory for tpu_custom_call.1']
    #allocation7 [shape = 'u8[32768]{0}', space=vmem, size = 0x8000, scoped, tag = 'output window, operand 0']
    #allocation8 [shape = 'u8[32768]{0}', space=vmem, size = 0x8000, scoped, tag = 'output window, operand 1']
    #allocation9 [shape = 's32[2]{0}', space=sflag, size = 0x8, scoped, tag = 'scoped memory for tpu_custom_call.1']
    %9 = vsyncpa [#allocation3], 0
    %s10 = scalar_lea.sflag [#allocation3], 1
    %11 = vsyncpa %s10, 0
    %12 = vsyncpa [#allocation6], 0
    %s13 = scalar_lea.sflag [#allocation6], 1
    %14 = vsyncpa %s13, 0
    %15 = vsyncpa [#allocation4], 0
    %s16 = scalar_lea.sflag [#allocation4], 1
    %17 = vsyncpa %s16, 0
    %18 = vsyncpa [#allocation9], 0
    %s19 = scalar_lea.sflag [#allocation9], 1
    %20 = vsyncpa %s19, 0
    loop: start=0, step=1, limit=4
    $region2: #{tpu_custom_call.1} parent=1 // loop_pre_header
      _
    $region3: #{tpu_custom_call.1} parent=1 // loop_header
      %s22 = sphi 0, %s26
      %p23 = scmp.ge.s32.totalorder %s22, 4
      %s29 = sphi 0, %s48
      %s30 = sphi 0, %s44
      %s31 = sphi 0, %s40
      %s32 = sphi 0, %s29
      %s33 = sphi 0, %s30
      %s34 = sphi 0, %s31
      %s35 = sphi 0, %s32
      %s36 = sphi 0, %s33
      %s37 = sphi 0, %s34
      %s59 = sphi 0, %s61
      %s62 = sphi 0, %s59
      %s63 = sphi 0, %s62
      %s79 = sphi 0, %s63
      %s93 = sphi 0, %s95
      %s96 = sphi 0, %s93
      %s97 = sphi 0, %s96
      %s113 = sphi 0, %s97
      %s121 = sphi 0, %s123
      %s124 = sphi 0, %s121
      %s125 = sphi 0, %s124
      %s141 = sphi 0, %s125
      %s149 = sphi 0, %s151
      %s152 = sphi 0, %s149
      %s153 = sphi 0, %s152
      %s169 = sphi 0, %s153
    $region4: #{tpu_custom_call.1} parent=1 // loop_header_branch
      %25 = sbr.rel (%p23) target = $region8
    $region5: #{tpu_custom_call.1} parent=1 // loop_body
      %s27 = ssub.s32 %s22, 1
      %s28 = ssub.s32 %s22, 2
      %s38 = sadd.s32 1, %s31
      %p39 = scmp.ge.s32.totalorder %s38, 1
      %s40 = scalar_select %p39, 0, %s38
      %s41 = sadd.s32 1, %s30
      %s42 = scalar_select %p39, %s41, %s30
      %p43 = scmp.ge.s32.totalorder %s42, 1
      %s44 = scalar_select %p43, 0, %s42
      %s45 = sadd.s32 1, %s29
      %s46 = scalar_select %p43, %s45, %s29
      %p47 = scmp.ge.s32.totalorder %s46, 2
      %s48 = scalar_select %p47, 0, %s46
      %s49 = sadd.s32 %s30, %s31
      %p50 = scmp.lt.s32.totalorder %s49, 0
      %s51 = scalar_select %p50, %s49, 0
      %s52 = sadd.s32 %s44, %s40
      %p53 = scmp.lt.s32.totalorder %s52, 0
      %s54 = scalar_select %p53, %s52, 0
      %s55 = ssub.s32 %s29, %s48
      %s56 = ssub.s32 %s51, %s54
      %s57 = sor.u32 %s55, %s56
      %p58 = scmp.eq.s32.totalorder %s57, 0
      %s60 = sadd.s32 %s59, 1
      %s61 = scalar_select %p58, %s59, %s60
      %p64 = pneg %p58
      %p65 = scmp.eq.s32.totalorder %s22, 1
      %p66 = por %p64, %p65
      %p67 = scmp.ne.s32.totalorder %s59, %s62
      %p68 = scmp.eq.s32.totalorder %s22, 0
      %p69 = por %p67, %p68
      %p70 = scmp.ne.s32.totalorder %s59, %s62
      %p71 = scmp.eq.s32.totalorder %s27, 1
      %p72 = por %p70, %p71
      %p73 = scmp.ne.s32.totalorder %s62, %s63
      %p74 = scmp.eq.s32.totalorder %s27, 0
      %p75 = por %p73, %p74
      %p76 = scmp.ne.s32.totalorder %s62, %s63
      %p77 = scmp.eq.s32.totalorder %s28, 1
      %p78 = por %p76, %p77
      %p80 = scmp.ne.s32.totalorder %s63, %s79
      %p81 = scmp.eq.s32.totalorder %s28, 0
      %p82 = por %p80, %p81
      %s83 = sadd.s32 %s30, %s31
      %p84 = scmp.lt.s32.totalorder %s83, 0
      %s85 = scalar_select %p84, %s83, 0
      %s86 = sadd.s32 %s44, %s40
      %p87 = scmp.lt.s32.totalorder %s86, 0
      %s88 = scalar_select %p87, %s86, 0
      %s89 = ssub.s32 %s29, %s48
      %s90 = ssub.s32 %s85, %s88
      %s91 = sor.u32 %s89, %s90
      %p92 = scmp.eq.s32.totalorder %s91, 0
      %s94 = sadd.s32 %s93, 1
      %s95 = scalar_select %p92, %s93, %s94
      %p98 = pneg %p92
      %p99 = scmp.eq.s32.totalorder %s22, 1
      %p100 = por %p98, %p99
      %p101 = scmp.ne.s32.totalorder %s93, %s96
      %p102 = scmp.eq.s32.totalorder %s22, 0
      %p103 = por %p101, %p102
      %p104 = scmp.ne.s32.totalorder %s93, %s96
      %p105 = scmp.eq.s32.totalorder %s27, 1
      %p106 = por %p104, %p105
      %p107 = scmp.ne.s32.totalorder %s96, %s97
      %p108 = scmp.eq.s32.totalorder %s27, 0
      %p109 = por %p107, %p108
      %p110 = scmp.ne.s32.totalorder %s96, %s97
      %p111 = scmp.eq.s32.totalorder %s28, 1
      %p112 = por %p110, %p111
      %p114 = scmp.ne.s32.totalorder %s97, %s113
      %p115 = scmp.eq.s32.totalorder %s28, 0
      %p116 = por %p114, %p115
      %s117 = ssub.s32 %s29, %s48
      %s118 = ssub.s32 %s30, %s44
      %s119 = sor.u32 %s117, %s118
      %p120 = scmp.eq.s32.totalorder %s119, 0
      %s122 = sadd.s32 %s121, 1
      %s123 = scalar_select %p120, %s121, %s122
      %p126 = pneg %p120
      %p127 = scmp.eq.s32.totalorder %s22, 1
      %p128 = por %p126, %p127
      %p129 = scmp.ne.s32.totalorder %s121, %s124
      %p130 = scmp.eq.s32.totalorder %s22, 0
      %p131 = por %p129, %p130
      %p132 = scmp.ne.s32.totalorder %s121, %s124
      %p133 = scmp.eq.s32.totalorder %s27, 1
      %p134 = por %p132, %p133
      %p135 = scmp.ne.s32.totalorder %s124, %s125
      %p136 = scmp.eq.s32.totalorder %s27, 0
      %p137 = por %p135, %p136
      %p138 = scmp.ne.s32.totalorder %s124, %s125
      %p139 = scmp.eq.s32.totalorder %s28, 1
      %p140 = por %p138, %p139
      %p142 = scmp.ne.s32.totalorder %s125, %s141
      %p143 = scmp.eq.s32.totalorder %s28, 0
      %p144 = por %p142, %p143
      %s145 = ssub.s32 %s29, %s48
      %s146 = ssub.s32 %s30, %s44
      %s147 = sor.u32 %s145, %s146
      %p148 = scmp.eq.s32.totalorder %s147, 0
      %s150 = sadd.s32 %s149, 1
      %s151 = scalar_select %p148, %s149, %s150
      %p154 = pneg %p148
      %p155 = scmp.eq.s32.totalorder %s22, 1
      %p156 = por %p154, %p155
      %p157 = scmp.ne.s32.totalorder %s149, %s152
      %p158 = scmp.eq.s32.totalorder %s22, 0
      %p159 = por %p157, %p158
      %p160 = scmp.ne.s32.totalorder %s149, %s152
      %p161 = scmp.eq.s32.totalorder %s27, 1
      %p162 = por %p160, %p161
      %p163 = scmp.ne.s32.totalorder %s152, %s153
      %p164 = scmp.eq.s32.totalorder %s27, 0
      %p165 = por %p163, %p164
      %p166 = scmp.ne.s32.totalorder %s152, %s153
      %p167 = scmp.eq.s32.totalorder %s28, 1
      %p168 = por %p166, %p167
      %p170 = scmp.ne.s32.totalorder %s153, %s169
      %p171 = scmp.eq.s32.totalorder %s28, 0
      %p172 = por %p170, %p171
      %p173 = scmp.le.s32.totalorder 1, %s22
      %p174 = scmp.lt.s32.totalorder %s22, 3
      %p175 = pnand %p173, %p174
      %p176 = pneg %p175
      // Predicated region
      $region9: #{tpu_custom_call.1} parent=5 // pred_check
        _
      $region10: #{tpu_custom_call.1} parent=5 // pred_check_branch
        %178 = sbr.rel (%p175) target = $region12
      $region11: #{tpu_custom_call.1} parent=5 // pred_region
        %s179 = ssub.s32 %s22, 1
      $region12: #{tpu_custom_call.1} parent=5 // pred_fallthru
        _
      %p180 = scmp.lt.s32.totalorder %s22, 2
      // Predicated region
      $region13: #{tpu_custom_call.1} parent=5 // pred_check
        %p181 = pneg %p180
      $region14: #{tpu_custom_call.1} parent=5 // pred_check_branch
        %183 = sbr.rel (%p181) target = $region16
      $region15: #{tpu_custom_call.1} parent=5 // pred_region
        // Predicated region
        $region17: #{tpu_custom_call.1} parent=15 // pred_check
          %p184 = pneg %p69
        $region18: #{tpu_custom_call.1} parent=15 // pred_check_branch
          %186 = sbr.rel (%p184) target = $region20
        $region19: #{tpu_custom_call.1} parent=15 // pred_region
          %s187 = sand.u32 %s59, 1
          %s188 = scalar_lea.sflag [#allocation3], %s187
          %s189 = sand.u32 %s59, 1
          %s190 = smul.addr %s189, 32
          %s191 = scalar_lea.vmem [#allocation2], %s190
          %s192 = sadd.s32 %s30, %s31
          %p193 = scmp.lt.s32.totalorder %s192, 0
          %s194 = scalar_select %p193, %s192, 0
          %196 = vsyncadd %s188, 0
          %s197 = smul.addr %s29, 4
          %s198 = sadd.s32 %s194, %s197
          %s199 = smul.addr %s198, 8
          %s200 = scalar_lea.hbm %s0, %s199
          %s201 = sshll.u32 %s200, 4
          %s202 = int_to_ptr.hbm [resolvable:$true] %s201
          %s203 = sshll.u32 %s191, 4
          %s204 = int_to_ptr.vmem [resolvable:$true] %s203
          %209 = dma.hbm_to_vmem [thread:$0]  %s202, 512, %s204, %s188, 128, 128, 8
        $region20: #{tpu_custom_call.1} parent=15 // pred_fallthru
          _
        // Predicated region
        $region21: #{tpu_custom_call.1} parent=15 // pred_check
          %p210 = pneg %p103
        $region22: #{tpu_custom_call.1} parent=15 // pred_check_branch
          %212 = sbr.rel (%p210) target = $region24
        $region23: #{tpu_custom_call.1} parent=15 // pred_region
          %s213 = sand.u32 %s93, 1
          %s214 = scalar_lea.sflag [#allocation6], %s213
          %s215 = sand.u32 %s93, 1
          %s216 = smul.addr %s215, 8
          %s217 = scalar_lea.vmem [#allocation5], %s216
          %s218 = sadd.s32 %s30, %s31
          %p219 = scmp.lt.s32.totalorder %s218, 0
          %s220 = scalar_select %p219, %s218, 0
          %222 = vsyncadd %s214, 0
          %s223 = sadd.s32 %s220, %s29
          %s224 = smul.addr %s223, 8
          %s225 = scalar_lea.hbm %s1, %s224
          %s227 = sshll.u32 %s225, 4
          %s228 = int_to_ptr.hbm [resolvable:$true] %s227
          %s229 = sshll.u32 %s217, 4
          %s230 = int_to_ptr.vmem [resolvable:$true] %s229
          %232 = dma.hbm_to_vmem [thread:$0]  %s228, 128, %s230, %s214
        $region24: #{tpu_custom_call.1} parent=15 // pred_fallthru
          _
      $region16: #{tpu_custom_call.1} parent=5 // pred_fallthru
        _
      %p233 = scmp.le.s32.totalorder 1, %s22
      %p234 = scmp.lt.s32.totalorder %s22, 3
      %p235 = pnand %p233, %p234
      %p236 = pneg %p235
      // Predicated region
      $region25: #{tpu_custom_call.1} parent=5 // pred_check
        _
      $region26: #{tpu_custom_call.1} parent=5 // pred_check_branch
        %238 = sbr.rel (%p235) target = $region28
      $region27: #{tpu_custom_call.1} parent=5 // pred_region
        %s239 = ssub.s32 %s22, 1
        %s240 = sand.u32 %s62, 1
        %s241 = scalar_lea.sflag [#allocation3], %s240
        %s242 = sand.u32 %s62, 1
        %s243 = smul.addr %s242, 32
        %s244 = scalar_lea.vmem [#allocation2], %s243
        // Predicated region
        $region29: #{tpu_custom_call.1} parent=27 // pred_check
          %p245 = pneg %p75
        $region30: #{tpu_custom_call.1} parent=27 // pred_check_branch
          %247 = sbr.rel (%p245) target = $region32
        $region31: #{tpu_custom_call.1} parent=27 // pred_region
          %249 = dma.done %s241, 512
        $region32: #{tpu_custom_call.1} parent=27 // pred_fallthru
          _
        %s250 = sand.u32 %s96, 1
        %s251 = scalar_lea.sflag [#allocation6], %s250
        %s252 = sand.u32 %s96, 1
        %s253 = smul.addr %s252, 8
        %s254 = scalar_lea.vmem [#allocation5], %s253
        // Predicated region
        $region33: #{tpu_custom_call.1} parent=27 // pred_check
          %p255 = pneg %p109
        $region34: #{tpu_custom_call.1} parent=27 // pred_check_branch
          %257 = sbr.rel (%p255) target = $region36
        $region35: #{tpu_custom_call.1} parent=27 // pred_region
          %259 = dma.done %s251, 128
        $region36: #{tpu_custom_call.1} parent=27 // pred_fallthru
          _
        %s260 = sand.u32 %s62, 1
        %s261 = scalar_lea.sflag [#allocation3], %s260
        %s262 = sand.u32 %s62, 1
        %s263 = smul.addr %s262, 32
        %s264 = scalar_lea.vmem [#allocation2], %s263
        %p265 = pneg %p75
        %p266 = pneg %p72
        %s267 = sand.u32 %s96, 1
        %s268 = scalar_lea.sflag [#allocation6], %s267
        %s269 = sand.u32 %s96, 1
        %s270 = smul.addr %s269, 8
        %s271 = scalar_lea.vmem [#allocation5], %s270
        %p272 = pneg %p109
        %p273 = pneg %p106
        %p274 = pneg %p137
        %p275 = pneg %p134
        %s276 = sand.u32 %s124, 1
        %s277 = scalar_lea.sflag [#allocation4], %s276
        %s278 = sand.u32 %s124, 1
        %s279 = smul.addr %s278, 32
        %s280 = scalar_lea.vmem [#allocation7], %s279
        %p281 = pneg %p165
        %p282 = pneg %p162
        %s283 = sand.u32 %s152, 1
        %s284 = scalar_lea.sflag [#allocation9], %s283
        %s285 = sand.u32 %s152, 1
        %s286 = smul.addr %s285, 32
        %s287 = scalar_lea.vmem [#allocation8], %s286
        %s288 = sadd.s32 %s33, %s34
        %p289 = scmp.lt.s32.totalorder %s288, 0
        %s290 = scalar_select %p289, %s288, 0
        %s291 = sadd.s32 %s33, %s34
        %p292 = scmp.lt.s32.totalorder %s291, 0
        %s293 = scalar_select %p292, %s291, 0
        %s294 = sadd.s32 %s33, %s34
        %p295 = scmp.eq.s32.totalorder %s34, 0
        // Predicated region
        $region37: #{tpu_custom_call.1} parent=27 // pred_check
          %p296 = pneg %p295
        $region38: #{tpu_custom_call.1} parent=27 // pred_check_branch
          %298 = sbr.rel (%p296) target = $region40
        $region39: #{tpu_custom_call.1} parent=27 // pred_region
          %299 = vst [vmem:[%s280] sm:$0xff] 0.0
          %300 = vst [vmem:[%s280 + $0x8] sm:$0xff] 0.0
          %301 = vst [vmem:[%s280 + $0x10] sm:$0xff] 0.0
          %302 = vst [vmem:[%s280 + $0x18] sm:$0xff] 0.0
          %303 = vst [vmem:[%s287] sm:$0xff] 0.0
          %304 = vst [vmem:[%s287 + $0x8] sm:$0xff] 0.0
          %305 = vst [vmem:[%s287 + $0x10] sm:$0xff] 0.0
          %306 = vst [vmem:[%s287 + $0x18] sm:$0xff] 0.0
        $region40: #{tpu_custom_call.1} parent=27 // pred_fallthru
          _
        %v307 = vld [vmem:[%s254] sm:$0xff]
        %v308 = vld [vmem:[%s244] sm:$0xff]
        %s309 = sadd.s32 0, 8
        %s310 = scalar_lea.vmem %s244, %s309 [#allocation2]
        %v311 = vld [vmem:[%s310] sm:$0xff]
        %s312 = sadd.s32 0, 16
        %s313 = scalar_lea.vmem %s244, %s312 [#allocation2]
        %v314 = vld [vmem:[%s313] sm:$0xff]
        %s315 = sadd.s32 0, 24
        %s316 = scalar_lea.vmem %s244, %s315 [#allocation2]
        %v317 = vld [vmem:[%s316] sm:$0xff]
        %v318 = vlaneseq
        %v319 = vshrl.u32 %v318, 7
        %v320 = vlaneseq
        %v321 = vand.u32 %v320, 127
        %s322 = smul.u32 %s294, 8
        %s323 = sadd.s32 %s322, 0
        %v324 = vstv %s323
        %v325 = vadd.s32 %v324, %v319
        %v326 = vmul.u32 %v325, 128
        %v327 = vadd.s32 %v326, %v321
        %vm328 = vcmp.lt.s32.totalorder %v327, 256
        %v329 = vsel %vm328, %v308, 0.0
        %v330 = vsel %vm328, %v311, 0.0
        %v331 = vsel %vm328, %v314, 0.0
        %v332 = vsel %vm328, %v317, 0.0
        %v333 = vmax.f32 %v329, %v330
        %v334 = vmax.f32 %v333, %v331
        %v335 = vmax.f32 %v334, %v332
        %v336 = vsub.f32 %v329, %v335
        %v337 = vmul.f32 %v336, 1.442695
        %v338 = vpow.pop %v337
        %v339 = vsub.f32 %v330, %v335
        %v340 = vmul.f32 %v339, 1.442695
        %v341 = vpow.pop %v340
        %v342 = vsub.f32 %v331, %v335
        %v343 = vmul.f32 %v342, 1.442695
        %v344 = vpow.pop %v343
        %v345 = vsub.f32 %v332, %v335
        %v346 = vmul.f32 %v345, 1.442695
        %v347 = vpow.pop %v346
        %v348 = vadd.f32 %v338, %v341
        %v349 = vadd.f32 %v348, %v344
        %v350 = vadd.f32 %v349, %v347
        %v351 = vrcp.pop %v350
        %v352 = vmul.f32 %v350, %v351
        %v353 = vsub.f32 1.0, %v352
        %v354 = vmul.f32 %v351, %v353
        %v355 = vadd.f32 %v351, %v354
        %vm356 = vweird.f32 %v350
        %vm357 = vweird.f32 %v351
        %vm358 = vmor %vm356, %vm357
        %v359 = vsel %vm358, %v351, %v355
        %v360 = vand.u32 2147483647, %v350
        %vm361 = vcmp.eq.f32.partialorder %v360, 8.507059e+37
        %v362 = vand.u32 %v350, 2147483648
        %v363 = vor.u32 1.1754944e-38, %v362
        %v364 = vsel %vm361, %v363, %v359
        %v365 = vmul.f32 %v338, %v364
        %vm366 = vcmp.eq.s32.totalorder %v307, 0
        %v367 = vsel %vm366, 1, 0
        %v368 = vcvt.s32.f32 %v367
        %v369 = vmul.f32 %v365, %v368
        %v370 = vadd.f32 %v365, %v368
        %v371 = vsel %vm328, %v369, 0.0
        %v372 = vsel %vm328, %v370, 0.0
        %v373 = vadd.f32 %v371, 0.0
        %v374 = vadd.f32 %v372, 0.0
        %v375 = vmul.f32 %v341, %v364
        %vm376 = vcmp.eq.s32.totalorder %v307, 1
        %v377 = vsel %vm376, 1, 0
        %v378 = vcvt.s32.f32 %v377
        %v379 = vmul.f32 %v375, %v378
        %v380 = vadd.f32 %v375, %v378
        %v381 = vsel %vm328, %v379, 0.0
        %v382 = vsel %vm328, %v380, 0.0
        %v383 = vadd.f32 %v381, 0.0
        %v384 = vadd.f32 %v382, 0.0
        %v385 = vmul.f32 %v344, %v364
        %vm386 = vcmp.eq.s32.totalorder %v307, 2
        %v387 = vsel %vm386, 1, 0
        %v388 = vcvt.s32.f32 %v387
        %v389 = vmul.f32 %v385, %v388
        %v390 = vadd.f32 %v385, %v388
        %v391 = vsel %vm328, %v389, 0.0
        %v392 = vsel %vm328, %v390, 0.0
        %v393 = vadd.f32 %v391, 0.0
        %v394 = vadd.f32 %v392, 0.0
        %v395 = vmul.f32 %v347, %v364
        %vm396 = vcmp.eq.s32.totalorder %v307, 3
        %v397 = vsel %vm396, 1, 0
        %v398 = vcvt.s32.f32 %v397
        %v399 = vmul.f32 %v395, %v398
        %v400 = vadd.f32 %v395, %v398
        %v401 = vsel %vm328, %v399, 0.0
        %v402 = vsel %vm328, %v400, 0.0
        %v403 = vadd.f32 %v401, 0.0
        %v404 = vadd.f32 %v402, 0.0
        %v405 = vld [vmem:[%s280] sm:$0xff]
        %v406 = vadd.f32 %v405, %v373
        %407 = vst [vmem:[%s280] sm:$0xff] %v406
        %v408 = vld [vmem:[%s287] sm:$0xff]
        %v409 = vadd.f32 %v408, %v374
        %410 = vst [vmem:[%s287] sm:$0xff] %v409
        %s411 = scalar_lea.vmem %s280, 8 [#allocation7]
        %v412 = vld [vmem:[%s411] sm:$0xff]
        %v413 = vadd.f32 %v412, %v383
        %414 = vst [vmem:[%s411] sm:$0xff] %v413
        %s415 = scalar_lea.vmem %s287, 8 [#allocation8]
        %v416 = vld [vmem:[%s415] sm:$0xff]
        %v417 = vadd.f32 %v416, %v384
        %418 = vst [vmem:[%s415] sm:$0xff] %v417
        %s419 = scalar_lea.vmem %s280, 16 [#allocation7]
        %v420 = vld [vmem:[%s419] sm:$0xff]
        %v421 = vadd.f32 %v420, %v393
        %422 = vst [vmem:[%s419] sm:$0xff] %v421
        %s423 = scalar_lea.vmem %s287, 16 [#allocation8]
        %v424 = vld [vmem:[%s423] sm:$0xff]
        %v425 = vadd.f32 %v424, %v394
        %426 = vst [vmem:[%s423] sm:$0xff] %v425
        %s427 = scalar_lea.vmem %s280, 24 [#allocation7]
        %v428 = vld [vmem:[%s427] sm:$0xff]
        %v429 = vadd.f32 %v428, %v403
        %430 = vst [vmem:[%s427] sm:$0xff] %v429
        %s431 = scalar_lea.vmem %s287, 24 [#allocation8]
        %v432 = vld [vmem:[%s431] sm:$0xff]
        %v433 = vadd.f32 %v432, %v404
        %434 = vst [vmem:[%s431] sm:$0xff] %v433
        %s435 = sand.u32 %s124, 1
        %s436 = scalar_lea.sflag [#allocation4], %s435
        %s437 = sand.u32 %s124, 1
        %s438 = smul.addr %s437, 32
        %s439 = scalar_lea.vmem [#allocation7], %s438
        %s440 = sand.u32 %s152, 1
        %s441 = scalar_lea.sflag [#allocation9], %s440
        %s442 = sand.u32 %s152, 1
        %s443 = smul.addr %s442, 32
        %s444 = scalar_lea.vmem [#allocation8], %s443
        // Predicated region
        $region41: #{tpu_custom_call.1} parent=27 // pred_check
          %p445 = pneg %p134
        $region42: #{tpu_custom_call.1} parent=27 // pred_check_branch
          %447 = sbr.rel (%p445) target = $region44
        $region43: #{tpu_custom_call.1} parent=27 // pred_region
          %449 = vsyncadd %s436, 0
          %s450 = smul.addr %s33, 4
          %s451 = smul.addr %s32, 4
          %s452 = sadd.s32 %s450, %s451
          %s453 = smul.addr %s452, 8
          %s454 = scalar_lea.hbm %s2, %s453
          %s455 = sshll.u32 %s439, 4
          %s456 = int_to_ptr.vmem [resolvable:$true] %s455
          %s457 = sshll.u32 %s454, 4
          %s458 = int_to_ptr.hbm [resolvable:$true] %s457
          %463 = dma.vmem_to_hbm [thread:$0]  %s456, 512, %s458, %s436, 128, 128, 8
        $region44: #{tpu_custom_call.1} parent=27 // pred_fallthru
          _
        // Predicated region
        $region45: #{tpu_custom_call.1} parent=27 // pred_check
          %p464 = pneg %p162
        $region46: #{tpu_custom_call.1} parent=27 // pred_check_branch
          %466 = sbr.rel (%p464) target = $region48
        $region47: #{tpu_custom_call.1} parent=27 // pred_region
          %468 = vsyncadd %s441, 0
          %s469 = smul.addr %s33, 4
          %s470 = smul.addr %s32, 4
          %s471 = sadd.s32 %s469, %s470
          %s472 = smul.addr %s471, 8
          %s473 = scalar_lea.hbm %s3, %s472
          %s474 = sshll.u32 %s444, 4
          %s475 = int_to_ptr.vmem [resolvable:$true] %s474
          %s476 = sshll.u32 %s473, 4
          %s477 = int_to_ptr.hbm [resolvable:$true] %s476
          %482 = dma.vmem_to_hbm [thread:$0]  %s475, 512, %s477, %s441, 128, 128, 8
        $region48: #{tpu_custom_call.1} parent=27 // pred_fallthru
          _
      $region28: #{tpu_custom_call.1} parent=5 // pred_fallthru
        _
      %p483 = scmp.le.s32.totalorder 2, %s22
      // Predicated region
      $region49: #{tpu_custom_call.1} parent=5 // pred_check
        %p484 = pneg %p483
      $region50: #{tpu_custom_call.1} parent=5 // pred_check_branch
        %486 = sbr.rel (%p484) target = $region52
      $region51: #{tpu_custom_call.1} parent=5 // pred_region
        %s487 = ssub.s32 %s22, 2
        // Predicated region
        $region53: #{tpu_custom_call.1} parent=51 // pred_check
          %p488 = pneg %p140
        $region54: #{tpu_custom_call.1} parent=51 // pred_check_branch
          %490 = sbr.rel (%p488) target = $region56
        $region55: #{tpu_custom_call.1} parent=51 // pred_region
          %s491 = sand.u32 %s125, 1
          %s492 = scalar_lea.sflag [#allocation4], %s491
          %s493 = sand.u32 %s125, 1
          %s494 = smul.addr %s493, 32
          %s495 = scalar_lea.vmem [#allocation7], %s494
          %497 = dma.done %s492, 512
        $region56: #{tpu_custom_call.1} parent=51 // pred_fallthru
          _
        // Predicated region
        $region57: #{tpu_custom_call.1} parent=51 // pred_check
          %p498 = pneg %p168
        $region58: #{tpu_custom_call.1} parent=51 // pred_check_branch
          %500 = sbr.rel (%p498) target = $region60
        $region59: #{tpu_custom_call.1} parent=51 // pred_region
          %s501 = sand.u32 %s153, 1
          %s502 = scalar_lea.sflag [#allocation9], %s501
          %s503 = sand.u32 %s153, 1
          %s504 = smul.addr %s503, 32
          %s505 = scalar_lea.vmem [#allocation8], %s504
          %507 = dma.done %s502, 512
        $region60: #{tpu_custom_call.1} parent=51 // pred_fallthru
          _
      $region52: #{tpu_custom_call.1} parent=5 // pred_fallthru
        _
    $region6: #{tpu_custom_call.1} parent=1 // loop_footer
      %s26 = sadd.s32 1, %s22
    $region7: #{tpu_custom_call.1} parent=1 // loop_footer_branch
      %21 = sbr.rel target = $region3
    $region8: #{tpu_custom_call.1} parent=1 // loop_exit
      _
    %508 = vsyncpa [#allocation3], 1
    %s509 = scalar_lea.sflag [#allocation3], 1
    %510 = vsyncpa %s509, 1
    %511 = vsyncpa [#allocation6], 1
    %s512 = scalar_lea.sflag [#allocation6], 1
    %513 = vsyncpa %s512, 1
    %514 = vsyncpa [#allocation4], 1
    %s515 = scalar_lea.sflag [#allocation4], 1
    %516 = vsyncpa %s515, 1
    %517 = vsyncpa [#allocation9], 1
    %s518 = scalar_lea.sflag [#allocation9], 1
    %519 = vsyncpa %s518, 1

</llo_original>
